<compile_context>
chip_gen: v5e
topology: v5e:2x2
jax: 0.10.0
libtpu: 0.0.40
codegen_flags: <defaults>
</compile_context>

<pallas_src>
import jax
import jax.numpy as jnp
from jax.experimental import pallas as pl
from jax.experimental.pallas import tpu as pltpu

_LANE = 128      # vreg lane width
_SUBLANE = 8     # f32 sublane count


def _round_up(x, m):
    return ((x + m - 1) // m) * m


def _mlp_kernel(x_ref, w1_ref, b1_ref, w2_ref, b2_ref, o_ref):
    # hidden = relu(x @ W1 + b1)   (f32 accumulation on the MXU)
    h = jnp.dot(x_ref[...], w1_ref[...], preferred_element_type=jnp.float32)
    h = jnp.maximum(h + b1_ref[...], 0.0)        # b1 is (1, H_pad) -> broadcasts
    # out = h @ W2 + b2
    o = jnp.dot(h, w2_ref[...], preferred_element_type=jnp.float32)
    o_ref[...] = (o + b2_ref[...]).astype(o_ref.dtype)


def pad_params(w1, b1, w2, b2):
    """Pad params ONCE (hoisted out of the per-call path).

    Only the hidden dim H is lane-padded to 128: the padded W1 columns / b1
    entries are zero, so the extra hidden units are ReLU(0)=0 and the matching
    zero rows of W2 contribute nothing to the output.  F and O stay unpadded.
    """
    F_, H = w1.shape
    O = w2.shape[1]
    H_p = _round_up(H, _LANE)
    w1_p = jnp.pad(w1, ((0, 0), (0, H_p - H)))
    b1_p = jnp.pad(b1.reshape(1, H), ((0, 0), (0, H_p - H)))
    w2_p = jnp.pad(w2, ((0, H_p - H), (0, 0)))
    b2_p = b2.reshape(1, O)
    return w1_p, b1_p, w2_p, b2_p


def net_forward(x, w1_p, b1_p, w2_p, b2_p, *, batch_tile=2048):
    """x: (B, F) f32; padded params from `pad_params` -> (B, O) f32.

    Weights are stored as (in_features, out_features), i.e. the transpose of
    PyTorch's Linear.weight, so the kernel computes plain x @ W + b.
    """
    B, F_ = x.shape
    H_p = w1_p.shape[1]
    O = w2_p.shape[1]

    if B <= batch_tile:
        # Single program, no grid, whole arrays resident in VMEM.
        # No wrapper padding/slicing needed: this path is fixed-overhead bound.
        vmem = pltpu.MemorySpace.VMEM
        return pl.pallas_call(
            _mlp_kernel,
            out_shape=jax.ShapeDtypeStruct((B, O), jnp.float32),
            in_specs=[pl.BlockSpec(memory_space=vmem)] * 5,
            out_specs=pl.BlockSpec(memory_space=vmem),
        )(x, w1_p, b1_p, w2_p, b2_p)

    # Large batch: tile only the batch axis; weights/biases stay VMEM-resident
    # via constant index_maps; batch axis "parallel" (v7x dual-TC split).
    # Pad rows only to a sublane multiple; partial last tile handled by the
    # cdiv grid (out-of-bounds rows are masked on writeback).
    B_p = _round_up(B, _SUBLANE)
    if B_p != B:
        x = jnp.pad(x, ((0, B_p - B), (0, 0)))
    n_tiles = pl.cdiv(B_p, batch_tile)
    out = pl.pallas_call(
        _mlp_kernel,
        out_shape=jax.ShapeDtypeStruct((B_p, O), jnp.float32),
        grid=(n_tiles,),
        in_specs=[
            pl.BlockSpec((batch_tile, F_), lambda i: (i, 0)),   # x: F unpadded
            pl.BlockSpec((F_, H_p), lambda i: (0, 0)),          # W1 (resident)
            pl.BlockSpec((1, H_p), lambda i: (0, 0)),           # b1 (resident)
            pl.BlockSpec((H_p, O), lambda i: (0, 0)),           # W2 (resident)
            pl.BlockSpec((1, O), lambda i: (0, 0)),             # b2 (resident)
        ],
        out_specs=pl.BlockSpec((batch_tile, O), lambda i: (i, 0)),  # O unpadded
        compiler_params=pltpu.CompilerParams(
            dimension_semantics=("parallel",)),
    )(x, w1_p, b1_p, w2_p, b2_p)
    return out if B_p == B else out[:B]


def init_params(key, n_feature, n_hidden, n_output):
    """Deterministic init mirroring torch.nn.Linear defaults:
    U(-1/sqrt(fan_in), 1/sqrt(fan_in)) for both weight and bias."""
    k1, k2, k3, k4 = jax.random.split(key, 4)
    bound1 = 1.0 / jnp.sqrt(n_feature)
    bound2 = 1.0 / jnp.sqrt(n_hidden)
    # stored as (in, out) — i.e. the transpose of PyTorch's (out, in) weight
    w1 = jax.random.uniform(k1, (n_feature, n_hidden), jnp.float32, -bound1, bound1)
    b1 = jax.random.uniform(k2, (n_hidden,), jnp.float32, -bound1, bound1)
    w2 = jax.random.uniform(k3, (n_hidden, n_output), jnp.float32, -bound2, bound2)
    b2 = jax.random.uniform(k4, (n_output,), jnp.float32, -bound2, bound2)
    return w1, b1, w2, b2


if __name__ == "__main__":
    n_feature, n_hidden, n_output = 16, 32, 8
    batch = 8

    key = jax.random.PRNGKey(0)
    kx, kp, kx2 = jax.random.split(key, 3)
    w1, b1, w2, b2 = init_params(kp, n_feature, n_hidden, n_output)
    params = pad_params(w1, b1, w2, b2)          # hoisted: pad once, reuse

    def ref_fn(xx):
        return jnp.maximum(xx @ w1 + b1, 0.0) @ w2 + b2

    fwd = jax.jit(net_forward)

    # --- small batch (single-program, no-grid path) ---
    x = jax.random.normal(kx, (batch, n_feature), jnp.float32)
    out = jax.block_until_ready(fwd(x, *params))
    assert out.shape == (batch, n_output)
    assert jnp.allclose(out, ref_fn(x), atol=1e-5, rtol=1e-5)

    # --- larger batch (batch-tiled grid path: default tile=2048 -> 3 tiles,
    #     partial last tile, batch not a multiple of 8) ---
    big_batch = 4100
    x_big = jax.random.normal(kx2, (big_batch, n_feature), jnp.float32)
    out_big = jax.block_until_ready(fwd(x_big, *params))
    assert out_big.shape == (big_batch, n_output)
    assert jnp.allclose(out_big, ref_fn(x_big), atol=1e-5, rtol=1e-5)

    print("KERNEL_OK")
</pallas_src>

<mosaic_0001>
module attributes {stable_mosaic.version = 11 : i64} {
  func.func @_mlp_kernel(%arg0: memref<8x16xf32, #tpu.memory_space<vmem>>, %arg1: memref<16x128xf32, #tpu.memory_space<vmem>>, %arg2: memref<1x128xf32, #tpu.memory_space<vmem>>, %arg3: memref<128x8xf32, #tpu.memory_space<vmem>>, %arg4: memref<1x8xf32, #tpu.memory_space<vmem>>, %arg5: memref<8x8xf32, #tpu.memory_space<vmem>>) attributes {dimension_semantics = [], scalar_prefetch = 0 : i64, scratch_operands = 0 : i64, tpu.core_type = #tpu.core_type<tc>} {
    %c0 = arith.constant 0 : index
    %c0_0 = arith.constant 0 : index
    %0 = vector.load %arg0[%c0, %c0_0] : memref<8x16xf32, #tpu.memory_space<vmem>>, vector<8x16xf32>
    %c0_1 = arith.constant 0 : index
    %c0_2 = arith.constant 0 : index
    %1 = vector.load %arg1[%c0_1, %c0_2] : memref<16x128xf32, #tpu.memory_space<vmem>>, vector<16x128xf32>
    %cst = arith.constant dense<0.000000e+00> : vector<8x128xf32>
    %2 = tpu.matmul %0, %1, %cst {dimension_numbers = #tpu.dot_dimension_numbers<[1], [0], [0], [1], [0, 0, 1, 1], [], []>} : vector<8x16xf32>, vector<16x128xf32>, vector<8x128xf32> -> vector<8x128xf32>
    %c0_3 = arith.constant 0 : index
    %c0_4 = arith.constant 0 : index
    %3 = vector.load %arg2[%c0_3, %c0_4] : memref<1x128xf32, #tpu.memory_space<vmem>>, vector<1x128xf32>
    %4 = vector.broadcast %3 : vector<1x128xf32> to vector<8x128xf32>
    %5 = arith.addf %2, %4 : vector<8x128xf32>
    %cst_5 = arith.constant 0.000000e+00 : f32
    %6 = vector.broadcast %cst_5 : f32 to vector<8x128xf32>
    %7 = arith.maximumf %5, %6 : vector<8x128xf32>
    %c0_6 = arith.constant 0 : index
    %c0_7 = arith.constant 0 : index
    %8 = vector.load %arg3[%c0_6, %c0_7] : memref<128x8xf32, #tpu.memory_space<vmem>>, vector<128x8xf32>
    %cst_8 = arith.constant dense<0.000000e+00> : vector<8x8xf32>
    %9 = tpu.matmul %7, %8, %cst_8 {dimension_numbers = #tpu.dot_dimension_numbers<[1], [0], [0], [1], [0, 0, 1, 1], [], []>} : vector<8x128xf32>, vector<128x8xf32>, vector<8x8xf32> -> vector<8x8xf32>
    %c0_9 = arith.constant 0 : index
    %c0_10 = arith.constant 0 : index
    %10 = vector.load %arg4[%c0_9, %c0_10] : memref<1x8xf32, #tpu.memory_space<vmem>>, vector<1x8xf32>
    %11 = vector.broadcast %10 : vector<1x8xf32> to vector<8x8xf32>
    %12 = arith.addf %9, %11 : vector<8x8xf32>
    %c0_11 = arith.constant 0 : index
    %c0_12 = arith.constant 0 : index
    %13 = vector.load %arg5[%c0_11, %c0_12] : memref<8x8xf32, #tpu.memory_space<vmem>>, vector<8x8xf32>
    tpu.vector_store %arg5[%c0_11, %c0_12], %12 {strides = array<i32>} : memref<8x8xf32, #tpu.memory_space<vmem>>, vector<8x8xf32>,
    return
  }
}

</mosaic_0001>

<llo_original>
// kernel: net_forward.1
$region0: #{net_forward.1}
  #allocation0 [shape = 'u32[]', space=smem, size = 0x4, offset = 0x4, fixed_abs, tag = 'smem constant byte address 0x4 - core index']
  #allocation1 [shape = 'u32[72,128]{1,0:T(1,128)}', space=vmem, size = 0x9000, scoped, tag = 'internal scratch']
  %s0 = inlined_call_operand.vmem [shape: f32[8,16], index: 0, kind: input, shape index: {}]
  %s1 = inlined_call_operand.vmem [shape: f32[16,128], index: 1, kind: input, shape index: {}]
  %s2 = inlined_call_operand.vmem [shape: f32[1,128], index: 2, kind: input, shape index: {}]
  %s3 = inlined_call_operand.vmem [shape: f32[128,8], index: 3, kind: input, shape index: {}]
  %s4 = inlined_call_operand.vmem [shape: f32[1,8], index: 4, kind: input, shape index: {}]
  %s5 = inlined_call_operand.hbm [shape: f32[8,8], index: 5, kind: output, shape index: {}]
  %s6 = sld [smem:[#allocation0]]
  $region30: #{net_forward.1} parent=0
    _
  %s8 = ssub.s32 1, %s6
  %s9 = scalar_select 0, %s8, %s6
  $region1: #{net_forward.1} parent=0
    #allocation2 [shape = 'u8[4096]{0}', space=vmem, size = 0x1000, scoped, tag = 'output window, operand 0, single buffered']
    #allocation3 [shape = 's32[1]{0}', space=sflag, size = 0x4, scoped, tag = 'scoped memory for net_forward.1']
    %10 = vsyncpa [#allocation3], 0
    // Predicated region
    $region2: #{net_forward.1} parent=1 // pred_check
      _
    $region3: #{net_forward.1} parent=1 // pred_check_branch
      %12 = sbr.rel (0) target = $region5
    $region4: #{net_forward.1} parent=1 // pred_region
      _
    $region5: #{net_forward.1} parent=1 // pred_fallthru
      _
    // Predicated region
    $region6: #{net_forward.1} parent=1 // pred_check
      _
    $region7: #{net_forward.1} parent=1 // pred_check_branch
      %14 = sbr.rel (0) target = $region9
    $region8: #{net_forward.1} parent=1 // pred_region
      _
    $region9: #{net_forward.1} parent=1 // pred_fallthru
      _
    // Predicated region
    $region10: #{net_forward.1} parent=1 // pred_check
      _
    $region11: #{net_forward.1} parent=1 // pred_check_branch
      %16 = sbr.rel (0) target = $region13
    $region12: #{net_forward.1} parent=1 // pred_region
      _
    $region13: #{net_forward.1} parent=1 // pred_fallthru
      _
    // Predicated region
    $region14: #{net_forward.1} parent=1 // pred_check
      _
    $region15: #{net_forward.1} parent=1 // pred_check_branch
      %18 = sbr.rel (0) target = $region17
    $region16: #{net_forward.1} parent=1 // pred_region
      _
    $region17: #{net_forward.1} parent=1 // pred_fallthru
      _
    // Predicated region
    $region18: #{net_forward.1} parent=1 // pred_check
      _
    $region19: #{net_forward.1} parent=1 // pred_check_branch
      %20 = sbr.rel (0) target = $region21
    $region20: #{net_forward.1} parent=1 // pred_region
      _
    $region21: #{net_forward.1} parent=1 // pred_fallthru
      _
    %v21 = vld [vmem:[%s0] sm:$0xff]
    %v22 = vld [vmem:[%s1] sm:$0xff]
    %v23 = vld [vmem:[%s1 + $0x8] sm:$0xff]
    %v24 = vld [vmem:[%s2] sm:$0x1]
    %v26 = vperm.slane %v24, 0
    %vm28 = vcmask 130048
    %v30 = vsel %vm28, %v21, 0
    %32 = vmatpush.msra.mxu0 0.0
    %33 = vmatpush.msra.mxu0 0.0
    %34 = vmatpush.msra.mxu0 0.0
    %35 = vmatpush.msra.mxu0 0.0
    %36 = vmatpush.msra.mxu0 0.0
    %37 = vmatpush.msra.mxu0 0.0
    %38 = vmatpush.msra.mxu0 0.0
    %39 = vmatpush.msra.mxu0 0.0
    %40 = vmatpush.msra.mxu0 0.0
    %41 = vmatpush.msra.mxu0 0.0
    %42 = vmatpush.msra.mxu0 0.0
    %43 = vmatpush.msra.mxu0 0.0
    %44 = vmatpush.msra.mxu0 0.0
    %45 = vmatpush.msra.mxu0 0.0
    %46 = vmatpush.msra.mxu0 %v23
    %47 = vmatpush.msra.mxu0 %v22
    %48 = vmatmul.f32.gmra.mxu0 %v30
    %v49 = vpop.f32.mrf.mxu0
    %v50 = vadd.f32 %v26, %v49
    %51 = vdwg.mxu0
    %v52 = vmax.f32 %v50, 0.0
    %v53 = vld [vmem:[%s3] sm:$0xff]
    %v54 = vld [vmem:[%s3 + $0x8] sm:$0xff]
    %v55 = vld [vmem:[%s3 + $0x10] sm:$0xff]
    %v56 = vld [vmem:[%s3 + $0x18] sm:$0xff]
    %v57 = vld [vmem:[%s3 + $0x20] sm:$0xff]
    %v58 = vld [vmem:[%s3 + $0x28] sm:$0xff]
    %v59 = vld [vmem:[%s3 + $0x30] sm:$0xff]
    %v60 = vld [vmem:[%s3 + $0x38] sm:$0xff]
    %v61 = vld [vmem:[%s3 + $0x40] sm:$0xff]
    %v62 = vld [vmem:[%s3 + $0x48] sm:$0xff]
    %v63 = vld [vmem:[%s3 + $0x50] sm:$0xff]
    %v64 = vld [vmem:[%s3 + $0x58] sm:$0xff]
    %v65 = vld [vmem:[%s3 + $0x60] sm:$0xff]
    %v66 = vld [vmem:[%s3 + $0x68] sm:$0xff]
    %v67 = vld [vmem:[%s3 + $0x70] sm:$0xff]
    %v68 = vld [vmem:[%s3 + $0x78] sm:$0xff]
    %v69 = vld [vmem:[%s4] sm:$0x1]
    %v71 = vperm.slane %v69, 0
    %73 = vmatpush.msra.mxu0 %v68
    %74 = vmatpush.msra.mxu0 %v67
    %75 = vmatpush.msra.mxu0 %v66
    %76 = vmatpush.msra.mxu0 %v65
    %77 = vmatpush.msra.mxu0 %v64
    %78 = vmatpush.msra.mxu0 %v63
    %79 = vmatpush.msra.mxu0 %v62
    %80 = vmatpush.msra.mxu0 %v61
    %81 = vmatpush.msra.mxu0 %v60
    %82 = vmatpush.msra.mxu0 %v59
    %83 = vmatpush.msra.mxu0 %v58
    %84 = vmatpush.msra.mxu0 %v57
    %85 = vmatpush.msra.mxu0 %v56
    %86 = vmatpush.msra.mxu0 %v55
    %87 = vmatpush.msra.mxu0 %v54
    %88 = vmatpush.msra.mxu0 %v53
    %89 = vmatmul.f32.gmra.mxu0 %v52
    %v90 = vpop.f32.mrf.mxu0
    %v91 = vadd.f32 %v71, %v90
    %92 = vdwg.mxu0
    %vm93 = vcmask 64512
    %94 = vst.msk [vmem:[#allocation2] sm:$0xff] %vm93, %v91
    // Predicated region
    $region22: #{net_forward.1} parent=1 // pred_check
      _
    $region23: #{net_forward.1} parent=1 // pred_check_branch
      %96 = sbr.rel (0) target = $region25
    $region24: #{net_forward.1} parent=1 // pred_region
      %98 = vsyncadd [#allocation3], 0
      %s100 = sshll.u32 [#allocation2], 4
      %s101 = int_to_ptr.vmem [resolvable:$true] %s100
      %s102 = sshll.u32 %s5, 4
      %s103 = int_to_ptr.hbm [resolvable:$true] %s102
      %105 = dma.vmem_to_hbm [thread:$0]  %s101, 128, %s103, [#allocation3]
    $region25: #{net_forward.1} parent=1 // pred_fallthru
      _
    // Predicated region
    $region26: #{net_forward.1} parent=1 // pred_check
      _
    $region27: #{net_forward.1} parent=1 // pred_check_branch
      %107 = sbr.rel (0) target = $region29
    $region28: #{net_forward.1} parent=1 // pred_region
      %109 = dma.done [#allocation3], 128
    $region29: #{net_forward.1} parent=1 // pred_fallthru
      _
    %110 = vsyncpa [#allocation3], 1

</llo_original>
